<compile_context>
chip_gen: v6e
topology: v6e:2x2x1
jax: 0.10.0
libtpu: 0.0.40
codegen_flags: <defaults>
</compile_context>

<pallas_src>
import jax
import jax.numpy as jnp
from jax.experimental import pallas as pl
from jax.experimental.pallas import tpu as pltpu


def _round_up(x, m):
    return ((x + m - 1) // m) * m


def _cls_head_kernel(p_ref, wc_ref, bc_ref, wf_ref, bf_ref, o_ref):
    # p_ref: (Bt, Ho*Wo, KKC) bf16 im2col patches for one batch tile
    Bt, HoWo, KKC = p_ref.shape
    F = wc_ref.shape[1]
    # conv as ONE folded matmul on the MXU (bf16 operands, f32 accumulate)
    p = p_ref[...].reshape(Bt * HoWo, KKC)
    h = jnp.dot(p, wc_ref[...], preferred_element_type=jnp.float32)  # (Bt*HoWo, F)
    # global max pool over spatial positions (torch.amax(dim=[2,3])) FIRST,
    # then bias + ReLU on the small (Bt, F) result (monotonicity => identical).
    m = jnp.max(h.reshape(Bt, HoWo, F), axis=1)                      # (Bt, F)
    feat = jnp.maximum(m + bc_ref[...], 0.0)                         # (Bt, F)
    # final linear layer: bf16 operands, f32 accumulate, lane-dense padded slab
    logits = jnp.dot(feat.astype(jnp.bfloat16), wf_ref[...],
                     preferred_element_type=jnp.float32)
    o_ref[...] = logits + bf_ref[...]                                # (Bt, Cp)


def cls_head_forward(x, w_conv, b_conv, w_fc, b_fc, targets=None, *, kernel=3):
    """Mirrors ClsHead.forward with layers=1 (PyTorch defaults)."""
    N, Cin, H, W = x.shape
    F = w_conv.shape[0]
    C = w_fc.shape[0]
    padding = kernel // 2
    stride = 1 if min(H, W) <= 4 else 2
    Ho = (H + 2 * padding - kernel) // stride + 1
    Wo = (W + 2 * padding - kernel) // stride + 1
    HoWo = Ho * Wo
    KKC = kernel * kernel * Cin    # conv-matmul K dim: kept UNPADDED (full-dim block)
    Cp = _round_up(C, 128)         # lane-dense output slab

    # ---- batch tile sizing: ~4K matmul rows per step, VMEM-capped (v7x-safe) ----
    ROWS_TARGET = 4096
    TILE_VMEM_BUDGET = 12 << 20
    per_sample_bytes = (2 * HoWo * KKC * 2   # double-buffered bf16 patch block
                        + HoWo * F * 4       # f32 conv intermediate (pre-max)
                        + 2 * Cp * 4         # double-buffered f32 output block
                        + 2 * F * 4)         # feat scratch / slack
    bt_vmem = max(1, TILE_VMEM_BUDGET // per_sample_bytes)
    Bt = min(-(-ROWS_TARGET // HoWo), bt_vmem, _round_up(N, 8))
    Bt = max(8, _round_up(Bt, 8))
    # keep >= 2 grid steps for real batches so v7x's two TensorCores both work
    if N >= 16 and _round_up(N, Bt) // Bt < 2:
        Bt = max(8, _round_up(-(-N // 2), 8))
    Npad = _round_up(N, Bt)
    G = Npad // Bt

    # ---- glue: NCHW -> NHWC, pad, im2col patch extraction (bf16, no K padding) ----
    # TODO(synk): for stride-1 / large H*W, build the patch tile inside the kernel
    # from the padded NHWC tensor (shifted accumulating matmuls) to avoid the
    # duplicated im2col round-trip through HBM entirely.
    x_nhwc = jnp.transpose(x, (0, 2, 3, 1)).astype(jnp.bfloat16)
    x_pad = jnp.pad(x_nhwc, ((0, 0), (padding, padding), (padding, padding), (0, 0)))
    pieces = []
    for kh in range(kernel):
        for kw in range(kernel):
            pieces.append(
                x_pad[:, kh:kh + stride * Ho:stride, kw:kw + stride * Wo:stride, :])
    patches = jnp.concatenate(pieces, axis=-1).reshape(N, HoWo, KKC)
    patches = jnp.pad(patches, ((0, Npad - N), (0, 0), (0, 0)))

    # conv weight (F, Cin, K, K) -> (K*K*Cin, F) matching the patch order (bf16)
    wc = jnp.transpose(w_conv, (2, 3, 1, 0)).reshape(KKC, F).astype(jnp.bfloat16)
    bc = b_conv.reshape(1, F).astype(jnp.float32)
    wf = jnp.pad(jnp.transpose(w_fc, (1, 0)),
                 ((0, 0), (0, Cp - C))).astype(jnp.bfloat16)
    bf = jnp.pad(b_fc.astype(jnp.float32), (0, Cp - C)).reshape(1, Cp)

    flops = 2 * Npad * HoWo * KKC * F + 2 * Npad * F * Cp
    bytes_accessed = (patches.size * 2 + wc.size * 2 + wf.size * 2
                      + (bc.size + bf.size + Npad * Cp) * 4)

    # explicit VMEM budget with headroom (v7x: 64 MiB physical / 32 MiB default)
    est_vmem = (2 * Bt * HoWo * KKC * 2          # patch block, double-buffered
                + 2 * Bt * Cp * 4                # output block, double-buffered
                + Bt * HoWo * F * 4              # f32 conv intermediate
                + 2 * Bt * F * 4                 # feat / logits values
                + 2 * (KKC * F * 2 + F * 4 + F * Cp * 2 + Cp * 4))  # weights x2
    vmem_limit = int(min(max(2 * est_vmem, 16 << 20), 48 << 20))

    out = pl.pallas_call(
        _cls_head_kernel,
        out_shape=jax.ShapeDtypeStruct((Npad, Cp), jnp.float32),
        grid_spec=pltpu.PrefetchScalarGridSpec(
            num_scalar_prefetch=0,
            grid=(G,),
            in_specs=[
                pl.BlockSpec((Bt, HoWo, KKC), lambda n: (n, 0, 0)),
                pl.BlockSpec((KKC, F), lambda n: (0, 0)),
                pl.BlockSpec((1, F), lambda n: (0, 0)),
                pl.BlockSpec((F, Cp), lambda n: (0, 0)),
                pl.BlockSpec((1, Cp), lambda n: (0, 0)),
            ],
            out_specs=pl.BlockSpec((Bt, Cp), lambda n: (n, 0)),
        ),
        compiler_params=pltpu.CompilerParams(
            dimension_semantics=("parallel",),
            vmem_limit_bytes=vmem_limit),
        cost_estimate=pl.CostEstimate(
            flops=flops, transcendentals=0, bytes_accessed=bytes_accessed),
    )(patches, wc, bc, wf, bf)

    logits = out[:N, :C]
    d = {"pre_out": logits, "out": jnp.argmax(logits, axis=1)}
    if targets is not None:
        labels = targets[0]
        logp = jax.nn.log_softmax(logits, axis=-1)
        nll = -jnp.take_along_axis(logp, labels[:, None], axis=1)[:, 0]
        d["loss"] = jnp.mean(nll)  # CrossEntropyLoss(mean) then torch.mean (no-op)
    return d


def _reference(x, w_conv, b_conv, w_fc, b_fc, *, stride, padding):
    # Same bf16-operand / f32-accumulate convention as the kernel.
    y = jax.lax.conv_general_dilated(
        x.astype(jnp.bfloat16), w_conv.astype(jnp.bfloat16),
        window_strides=(stride, stride), padding=((padding, padding),) * 2,
        dimension_numbers=("NCHW", "OIHW", "NCHW"),
        preferred_element_type=jnp.float32)
    y = jnp.maximum(y + b_conv[None, :, None, None].astype(jnp.float32), 0.0)
    feat = jnp.max(y, axis=(2, 3))
    return (jnp.dot(feat.astype(jnp.bfloat16), w_fc.T.astype(jnp.bfloat16),
                    preferred_element_type=jnp.float32)
            + b_fc.astype(jnp.float32))


if __name__ == "__main__":
    key = jax.random.PRNGKey(0)
    N, Cin, H, W = 2, 4, 16, 16            # example_inputs[0].shape -> ch=4, side=16
    F, C = 128, 2                          # features=128 (default), num_classes=2

    k1, k2, k3, k4, k5, k6 = jax.random.split(key, 6)
    x = jax.random.normal(k1, (N, Cin, H, W), jnp.float32)
    w_conv = jax.random.normal(k2, (F, Cin, 3, 3), jnp.float32) * 0.1
    b_conv = jax.random.normal(k3, (F,), jnp.float32) * 0.1
    w_fc = jax.random.normal(k4, (C, F), jnp.float32) * 0.1
    b_fc = jax.random.normal(k5, (C,), jnp.float32) * 0.1
    targets = (jax.random.randint(k6, (N,), 0, C),)

    d = cls_head_forward(x, w_conv, b_conv, w_fc, b_fc, targets=targets)
    d = jax.block_until_ready(d)

    stride = 1 if min(H, W) <= 4 else 2
    ref_logits = _reference(x, w_conv, b_conv, w_fc, b_fc, stride=stride, padding=1)
    assert jnp.allclose(d["pre_out"], ref_logits, atol=2e-3, rtol=2e-3), \
        "pallas output mismatch vs reference"
    assert d["out"].shape == (N,) and d["pre_out"].shape == (N, C)
    assert jnp.isfinite(d["loss"])

    print("KERNEL_OK")
</pallas_src>

<mosaic_0001>
module attributes {stable_mosaic.version = 11 : i64} {
  func.func @_cls_head_kernel(%arg0: i32, %arg1: memref<8x64x36xbf16, #tpu.memory_space<vmem>>, %arg2: memref<36x128xbf16, #tpu.memory_space<vmem>>, %arg3: memref<1x128xf32, #tpu.memory_space<vmem>>, %arg4: memref<128x128xbf16, #tpu.memory_space<vmem>>, %arg5: memref<1x128xf32, #tpu.memory_space<vmem>>, %arg6: memref<8x128xf32, #tpu.memory_space<vmem>>) attributes {dimension_semantics = [#tpu.dimension_semantics<parallel>], iteration_bounds = array<i64: 1>, scalar_prefetch = 0 : i64, scratch_operands = 0 : i64, tpu.core_type = #tpu.core_type<tc>, window_params = [{transform_indices = @transform_0, window_bounds = array<i64: 8, 64, 36>}, {pipeline_mode = #tpu.pipeline_mode<synchronous>, transform_indices = @transform_1, window_bounds = array<i64: 36, 128>}, {pipeline_mode = #tpu.pipeline_mode<synchronous>, transform_indices = @transform_2, window_bounds = array<i64: 1, 128>}, {pipeline_mode = #tpu.pipeline_mode<synchronous>, transform_indices = @transform_3, window_bounds = array<i64: 128, 128>}, {pipeline_mode = #tpu.pipeline_mode<synchronous>, transform_indices = @transform_4, window_bounds = array<i64: 1, 128>}, {transform_indices = @transform_5, window_bounds = array<i64: 8, 128>}]} {
    %c0 = arith.constant 0 : index
    %c0_0 = arith.constant 0 : index
    %c0_1 = arith.constant 0 : index
    %0 = vector.load %arg1[%c0, %c0_0, %c0_1] : memref<8x64x36xbf16, #tpu.memory_space<vmem>>, vector<8x64x36xbf16>
    %1 = vector.shape_cast %0 : vector<8x64x36xbf16> to vector<512x36xbf16>
    %c0_2 = arith.constant 0 : index
    %c0_3 = arith.constant 0 : index
    %2 = vector.load %arg2[%c0_2, %c0_3] : memref<36x128xbf16, #tpu.memory_space<vmem>>, vector<36x128xbf16>
    %cst = arith.constant dense<0.000000e+00> : vector<512x128xf32>
    %3 = tpu.matmul %1, %2, %cst {dimension_numbers = #tpu.dot_dimension_numbers<[1], [0], [0], [1], [0, 0, 1, 1], [], []>} : vector<512x36xbf16>, vector<36x128xbf16>, vector<512x128xf32> -> vector<512x128xf32>
    %4 = vector.shape_cast %3 : vector<512x128xf32> to vector<8x64x128xf32>
    %cst_4 = arith.constant dense<0xFF800000> : vector<8x128xf32>
    %5 = vector.multi_reduction <maximumf>, %4, %cst_4 [1] : vector<8x64x128xf32> to vector<8x128xf32>
    %c0_5 = arith.constant 0 : index
    %c0_6 = arith.constant 0 : index
    %6 = vector.load %arg3[%c0_5, %c0_6] : memref<1x128xf32, #tpu.memory_space<vmem>>, vector<1x128xf32>
    %7 = vector.broadcast %6 : vector<1x128xf32> to vector<8x128xf32>
    %8 = arith.addf %5, %7 : vector<8x128xf32>
    %cst_7 = arith.constant 0.000000e+00 : f32
    %9 = vector.broadcast %cst_7 : f32 to vector<8x128xf32>
    %10 = arith.maximumf %8, %9 : vector<8x128xf32>
    %11 = arith.truncf %10 : vector<8x128xf32> to vector<8x128xbf16>
    %c0_8 = arith.constant 0 : index
    %c0_9 = arith.constant 0 : index
    %12 = vector.load %arg4[%c0_8, %c0_9] : memref<128x128xbf16, #tpu.memory_space<vmem>>, vector<128x128xbf16>
    %cst_10 = arith.constant dense<0.000000e+00> : vector<8x128xf32>
    %13 = tpu.matmul %11, %12, %cst_10 {dimension_numbers = #tpu.dot_dimension_numbers<[1], [0], [0], [1], [0, 0, 1, 1], [], []>} : vector<8x128xbf16>, vector<128x128xbf16>, vector<8x128xf32> -> vector<8x128xf32>
    %c0_11 = arith.constant 0 : index
    %c0_12 = arith.constant 0 : index
    %14 = vector.load %arg5[%c0_11, %c0_12] : memref<1x128xf32, #tpu.memory_space<vmem>>, vector<1x128xf32>
    %15 = vector.broadcast %14 : vector<1x128xf32> to vector<8x128xf32>
    %16 = arith.addf %13, %15 : vector<8x128xf32>
    %c0_13 = arith.constant 0 : index
    %c0_14 = arith.constant 0 : index
    %17 = vector.load %arg6[%c0_13, %c0_14] : memref<8x128xf32, #tpu.memory_space<vmem>>, vector<8x128xf32>
    tpu.vector_store %arg6[%c0_13, %c0_14], %16 {strides = array<i32>} : memref<8x128xf32, #tpu.memory_space<vmem>>, vector<8x128xf32>,
    return
  }
  func.func @transform_0(%arg0: i32) -> (i32, i32, i32) {
    %c0_i32 = arith.constant 0 : i32
    %c0_i32_0 = arith.constant 0 : i32
    %c0_i32_1 = arith.constant 0 : i32
    return %arg0, %c0_i32, %c0_i32_0 : i32, i32, i32
  }
  func.func @transform_1(%arg0: i32) -> (i32, i32) {
    %c0_i32 = arith.constant 0 : i32
    %c0_i32_0 = arith.constant 0 : i32
    %c0_i32_1 = arith.constant 0 : i32
    return %c0_i32, %c0_i32_0 : i32, i32
  }
  func.func @transform_2(%arg0: i32) -> (i32, i32) {
    %c0_i32 = arith.constant 0 : i32
    %c0_i32_0 = arith.constant 0 : i32
    %c0_i32_1 = arith.constant 0 : i32
    return %c0_i32, %c0_i32_0 : i32, i32
  }
  func.func @transform_3(%arg0: i32) -> (i32, i32) {
    %c0_i32 = arith.constant 0 : i32
    %c0_i32_0 = arith.constant 0 : i32
    %c0_i32_1 = arith.constant 0 : i32
    return %c0_i32, %c0_i32_0 : i32, i32
  }
  func.func @transform_4(%arg0: i32) -> (i32, i32) {
    %c0_i32 = arith.constant 0 : i32
    %c0_i32_0 = arith.constant 0 : i32
    %c0_i32_1 = arith.constant 0 : i32
    return %c0_i32, %c0_i32_0 : i32, i32
  }
  func.func @transform_5(%arg0: i32) -> (i32, i32) {
    %c0_i32 = arith.constant 0 : i32
    %c0_i32_0 = arith.constant 0 : i32
    return %arg0, %c0_i32 : i32, i32
  }
}

</mosaic_0001>

<llo_original>
// kernel: tpu_custom_call.1
$region0: #{tpu_custom_call.1}
  #allocation0 [shape = 'u32[]', space=smem, size = 0x4, offset = 0x4, fixed_abs, tag = 'smem constant byte address 0x4 - core index']
  #allocation1 [shape = 'u32[144,128]{1,0:T(1,128)}', space=vmem, size = 0x12000, scoped, tag = 'internal scratch']
  %s0 = inlined_call_operand.vmem [shape: bf16[8,64,36], index: 0, kind: input, shape index: {}]
  %s1 = inlined_call_operand.vmem [shape: bf16[36,128], index: 1, kind: input, shape index: {}]
  %s2 = inlined_call_operand.vmem [shape: f32[1,128], index: 2, kind: input, shape index: {}]
  %s3 = inlined_call_operand.vmem [shape: bf16[128,128], index: 3, kind: input, shape index: {}]
  %s4 = inlined_call_operand.vmem [shape: f32[1,128], index: 4, kind: input, shape index: {}]
  %s5 = inlined_call_operand.hbm [shape: f32[8,128], index: 5, kind: output, shape index: {}]
  %s6 = sld [smem:[#allocation0]]
  $region30: #{tpu_custom_call.1} parent=0
    _
  %s8 = ssub.s32 1, %s6
  %s9 = scalar_select 0, %s8, %s6
  $region1: #{tpu_custom_call.1} parent=0
    #allocation2 [shape = 'u8[4096]{0}', space=vmem, size = 0x1000, scoped, tag = 'output window, operand 0, single buffered']
    #allocation3 [shape = 's32[1]{0}', space=sflag, size = 0x4, scoped, tag = 'scoped memory for tpu_custom_call.1']
    %10 = vsyncpa [#allocation3], 0
    // Predicated region
    $region2: #{tpu_custom_call.1} parent=1 // pred_check
      _
    $region3: #{tpu_custom_call.1} parent=1 // pred_check_branch
      %12 = sbr.rel (0) target = $region5
    $region4: #{tpu_custom_call.1} parent=1 // pred_region
      _
    $region5: #{tpu_custom_call.1} parent=1 // pred_fallthru
      _
    // Predicated region
    $region6: #{tpu_custom_call.1} parent=1 // pred_check
      _
    $region7: #{tpu_custom_call.1} parent=1 // pred_check_branch
      %14 = sbr.rel (0) target = $region9
    $region8: #{tpu_custom_call.1} parent=1 // pred_region
      _
    $region9: #{tpu_custom_call.1} parent=1 // pred_fallthru
      _
    // Predicated region
    $region10: #{tpu_custom_call.1} parent=1 // pred_check
      _
    $region11: #{tpu_custom_call.1} parent=1 // pred_check_branch
      %16 = sbr.rel (0) target = $region13
    $region12: #{tpu_custom_call.1} parent=1 // pred_region
      _
    $region13: #{tpu_custom_call.1} parent=1 // pred_fallthru
      _
    // Predicated region
    $region14: #{tpu_custom_call.1} parent=1 // pred_check
      _
    $region15: #{tpu_custom_call.1} parent=1 // pred_check_branch
      %18 = sbr.rel (0) target = $region17
    $region16: #{tpu_custom_call.1} parent=1 // pred_region
      _
    $region17: #{tpu_custom_call.1} parent=1 // pred_fallthru
      _
    // Predicated region
    $region18: #{tpu_custom_call.1} parent=1 // pred_check
      _
    $region19: #{tpu_custom_call.1} parent=1 // pred_check_branch
      %20 = sbr.rel (0) target = $region21
    $region20: #{tpu_custom_call.1} parent=1 // pred_region
      _
    $region21: #{tpu_custom_call.1} parent=1 // pred_fallthru
      _
    %v22 = vld [vmem:[%s0] sm:$0xf]
    %v23 = vld [vmem:[%s0 + $0x4] sm:$0xf]
    %v24 = vld [vmem:[%s0 + $0x8] sm:$0xf]
    %v25 = vld [vmem:[%s0 + $0xc] sm:$0xf]
    %v26 = vld [vmem:[%s0 + $0x10] sm:$0xf]
    %v27 = vld [vmem:[%s0 + $0x14] sm:$0xf]
    %v28 = vld [vmem:[%s0 + $0x18] sm:$0xf]
    %v29 = vld [vmem:[%s0 + $0x1c] sm:$0xf]
    %v30 = vld [vmem:[%s0 + $0x20] sm:$0xf]
    %v31 = vld [vmem:[%s0 + $0x24] sm:$0xf]
    %v32 = vld [vmem:[%s0 + $0x28] sm:$0xf]
    %v33 = vld [vmem:[%s0 + $0x2c] sm:$0xf]
    %v34 = vld [vmem:[%s0 + $0x30] sm:$0xf]
    %v35 = vld [vmem:[%s0 + $0x34] sm:$0xf]
    %v36 = vld [vmem:[%s0 + $0x38] sm:$0xf]
    %v37 = vld [vmem:[%s0 + $0x3c] sm:$0xf]
    %v38 = vld [vmem:[%s0 + $0x40] sm:$0xf]
    %v39 = vld [vmem:[%s0 + $0x44] sm:$0xf]
    %v40 = vld [vmem:[%s0 + $0x48] sm:$0xf]
    %v41 = vld [vmem:[%s0 + $0x4c] sm:$0xf]
    %v42 = vld [vmem:[%s0 + $0x50] sm:$0xf]
    %v43 = vld [vmem:[%s0 + $0x54] sm:$0xf]
    %v44 = vld [vmem:[%s0 + $0x58] sm:$0xf]
    %v45 = vld [vmem:[%s0 + $0x5c] sm:$0xf]
    %v46 = vld [vmem:[%s0 + $0x60] sm:$0xf]
    %v47 = vld [vmem:[%s0 + $0x64] sm:$0xf]
    %v48 = vld [vmem:[%s0 + $0x68] sm:$0xf]
    %v49 = vld [vmem:[%s0 + $0x6c] sm:$0xf]
    %v50 = vld [vmem:[%s0 + $0x70] sm:$0xf]
    %v51 = vld [vmem:[%s0 + $0x74] sm:$0xf]
    %v52 = vld [vmem:[%s0 + $0x78] sm:$0xf]
    %v53 = vld [vmem:[%s0 + $0x7c] sm:$0xf]
    %v54 = vld [vmem:[%s0 + $0x80] sm:$0xf]
    %v55 = vld [vmem:[%s0 + $0x84] sm:$0xf]
    %v56 = vld [vmem:[%s0 + $0x88] sm:$0xf]
    %v57 = vld [vmem:[%s0 + $0x8c] sm:$0xf]
    %v58 = vld [vmem:[%s0 + $0x90] sm:$0xf]
    %v59 = vld [vmem:[%s0 + $0x94] sm:$0xf]
    %v60 = vld [vmem:[%s0 + $0x98] sm:$0xf]
    %v61 = vld [vmem:[%s0 + $0x9c] sm:$0xf]
    %v62 = vld [vmem:[%s0 + $0xa0] sm:$0xf]
    %v63 = vld [vmem:[%s0 + $0xa4] sm:$0xf]
    %v64 = vld [vmem:[%s0 + $0xa8] sm:$0xf]
    %v65 = vld [vmem:[%s0 + $0xac] sm:$0xf]
    %v66 = vld [vmem:[%s0 + $0xb0] sm:$0xf]
    %v67 = vld [vmem:[%s0 + $0xb4] sm:$0xf]
    %v68 = vld [vmem:[%s0 + $0xb8] sm:$0xf]
    %v69 = vld [vmem:[%s0 + $0xbc] sm:$0xf]
    %v70 = vld [vmem:[%s0 + $0xc0] sm:$0xf]
    %v71 = vld [vmem:[%s0 + $0xc4] sm:$0xf]
    %v72 = vld [vmem:[%s0 + $0xc8] sm:$0xf]
    %v73 = vld [vmem:[%s0 + $0xcc] sm:$0xf]
    %v74 = vld [vmem:[%s0 + $0xd0] sm:$0xf]
    %v75 = vld [vmem:[%s0 + $0xd4] sm:$0xf]
    %v76 = vld [vmem:[%s0 + $0xd8] sm:$0xf]
    %v77 = vld [vmem:[%s0 + $0xdc] sm:$0xf]
    %v78 = vld [vmem:[%s0 + $0xe0] sm:$0xf]
    %v79 = vld [vmem:[%s0 + $0xe4] sm:$0xf]
    %v80 = vld [vmem:[%s0 + $0xe8] sm:$0xf]
    %v81 = vld [vmem:[%s0 + $0xec] sm:$0xf]
    %v82 = vld [vmem:[%s0 + $0xf0] sm:$0xf]
    %v83 = vld [vmem:[%s0 + $0xf4] sm:$0xf]
    %v84 = vld [vmem:[%s0 + $0xf8] sm:$0xf]
    %v85 = vld [vmem:[%s0 + $0xfc] sm:$0xf]
    %v86 = vld [vmem:[%s1] sm:$0xf]
    %v87 = vld [vmem:[%s1 + $0x4] sm:$0xf]
    %v88 = vld [vmem:[%s1 + $0x8] sm:$0xf]
    %v89 = vld [vmem:[%s1 + $0xc] sm:$0xf]
    %v90 = vld [vmem:[%s1 + $0x10] sm:$0x3]
    %v155 = vunpack.c.l.b16 %v22
    %v156 = vunpack.c.l.b16 %v23
    %v157 = vunpack.c.l.b16 %v24
    %v158 = vunpack.c.l.b16 %v25
    %v159 = vunpack.c.l.b16 %v26
    %v160 = vunpack.c.l.b16 %v27
    %v161 = vunpack.c.l.b16 %v28
    %v162 = vunpack.c.l.b16 %v29
    %v163 = vunpack.c.l.b16 %v30
    %v164 = vunpack.c.l.b16 %v31
    %v165 = vunpack.c.l.b16 %v32
    %v166 = vunpack.c.l.b16 %v33
    %v167 = vunpack.c.l.b16 %v34
    %v168 = vunpack.c.l.b16 %v35
    %v169 = vunpack.c.l.b16 %v36
    %v170 = vunpack.c.l.b16 %v37
    %v171 = vunpack.c.l.b16 %v38
    %v172 = vunpack.c.l.b16 %v39
    %v173 = vunpack.c.l.b16 %v40
    %v174 = vunpack.c.l.b16 %v41
    %v175 = vunpack.c.l.b16 %v42
    %v176 = vunpack.c.l.b16 %v43
    %v177 = vunpack.c.l.b16 %v44
    %v178 = vunpack.c.l.b16 %v45
    %v179 = vunpack.c.l.b16 %v46
    %v180 = vunpack.c.l.b16 %v47
    %v181 = vunpack.c.l.b16 %v48
    %v182 = vunpack.c.l.b16 %v49
    %v183 = vunpack.c.l.b16 %v50
    %v184 = vunpack.c.l.b16 %v51
    %v185 = vunpack.c.l.b16 %v52
    %v186 = vunpack.c.l.b16 %v53
    %v187 = vunpack.c.l.b16 %v54
    %v188 = vunpack.c.l.b16 %v55
    %v189 = vunpack.c.l.b16 %v56
    %v190 = vunpack.c.l.b16 %v57
    %v191 = vunpack.c.l.b16 %v58
    %v192 = vunpack.c.l.b16 %v59
    %v193 = vunpack.c.l.b16 %v60
    %v194 = vunpack.c.l.b16 %v61
    %v195 = vunpack.c.l.b16 %v62
    %v196 = vunpack.c.l.b16 %v63
    %v197 = vunpack.c.l.b16 %v64
    %v198 = vunpack.c.l.b16 %v65
    %v199 = vunpack.c.l.b16 %v66
    %v200 = vunpack.c.l.b16 %v67
    %v201 = vunpack.c.l.b16 %v68
    %v202 = vunpack.c.l.b16 %v69
    %v203 = vunpack.c.l.b16 %v70
    %v204 = vunpack.c.l.b16 %v71
    %v205 = vunpack.c.l.b16 %v72
    %v206 = vunpack.c.l.b16 %v73
    %v207 = vunpack.c.l.b16 %v74
    %v208 = vunpack.c.l.b16 %v75
    %v209 = vunpack.c.l.b16 %v76
    %v210 = vunpack.c.l.b16 %v77
    %v211 = vunpack.c.l.b16 %v78
    %v212 = vunpack.c.l.b16 %v79
    %v213 = vunpack.c.l.b16 %v80
    %v214 = vunpack.c.l.b16 %v81
    %v215 = vunpack.c.l.b16 %v82
    %v216 = vunpack.c.l.b16 %v83
    %v217 = vunpack.c.l.b16 %v84
    %v218 = vunpack.c.l.b16 %v85
    %v219 = vpack.c.b16 %v156, %v155
    %v220 = vpack.c.b16 %v158, %v157
    %v221 = vpack.c.b16 %v160, %v159
    %v222 = vpack.c.b16 %v162, %v161
    %v223 = vpack.c.b16 %v164, %v163
    %v224 = vpack.c.b16 %v166, %v165
    %v225 = vpack.c.b16 %v168, %v167
    %v226 = vpack.c.b16 %v170, %v169
    %v227 = vpack.c.b16 %v172, %v171
    %v228 = vpack.c.b16 %v174, %v173
    %v229 = vpack.c.b16 %v176, %v175
    %v230 = vpack.c.b16 %v178, %v177
    %v231 = vpack.c.b16 %v180, %v179
    %v232 = vpack.c.b16 %v182, %v181
    %v233 = vpack.c.b16 %v184, %v183
    %v234 = vpack.c.b16 %v186, %v185
    %v235 = vpack.c.b16 %v188, %v187
    %v236 = vpack.c.b16 %v190, %v189
    %v237 = vpack.c.b16 %v192, %v191
    %v238 = vpack.c.b16 %v194, %v193
    %v239 = vpack.c.b16 %v196, %v195
    %v240 = vpack.c.b16 %v198, %v197
    %v241 = vpack.c.b16 %v200, %v199
    %v242 = vpack.c.b16 %v202, %v201
    %v243 = vpack.c.b16 %v204, %v203
    %v244 = vpack.c.b16 %v206, %v205
    %v245 = vpack.c.b16 %v208, %v207
    %v246 = vpack.c.b16 %v210, %v209
    %v247 = vpack.c.b16 %v212, %v211
    %v248 = vpack.c.b16 %v214, %v213
    %v249 = vpack.c.b16 %v216, %v215
    %v250 = vpack.c.b16 %v218, %v217
    %v256 = vunpack.c.l.b16 %v86
    %v257 = vunpack.c.l.b16 %v87
    %v258 = vunpack.c.l.b16 %v88
    %v259 = vunpack.c.l.b16 %v89
    %v260 = vunpack.c.l.b16 %v90
    %v261 = vpack.c.b16 %v257, %v256
    %v262 = vpack.c.b16 %v259, %v258
    %v263 = vpack.c.b16 %v260, %v260
    %vm266 = vcmask 293888
    %v268 = vsel %vm266, %v219, 0
    %v271 = vsel %vm266, %v220, 0
    %v274 = vsel %vm266, %v221, 0
    %v277 = vsel %vm266, %v222, 0
    %v280 = vsel %vm266, %v223, 0
    %v283 = vsel %vm266, %v224, 0
    %v286 = vsel %vm266, %v225, 0
    %v289 = vsel %vm266, %v226, 0
    %v292 = vsel %vm266, %v227, 0
    %v295 = vsel %vm266, %v228, 0
    %v298 = vsel %vm266, %v229, 0
    %v301 = vsel %vm266, %v230, 0
    %v304 = vsel %vm266, %v231, 0
    %v307 = vsel %vm266, %v232, 0
    %v310 = vsel %vm266, %v233, 0
    %v313 = vsel %vm266, %v234, 0
    %v316 = vsel %vm266, %v235, 0
    %v319 = vsel %vm266, %v236, 0
    %v322 = vsel %vm266, %v237, 0
    %v325 = vsel %vm266, %v238, 0
    %v328 = vsel %vm266, %v239, 0
    %v331 = vsel %vm266, %v240, 0
    %v334 = vsel %vm266, %v241, 0
    %v337 = vsel %vm266, %v242, 0
    %v340 = vsel %vm266, %v243, 0
    %v343 = vsel %vm266, %v244, 0
    %v346 = vsel %vm266, %v245, 0
    %v349 = vsel %vm266, %v246, 0
    %v352 = vsel %vm266, %v247, 0
    %v355 = vsel %vm266, %v248, 0
    %v358 = vsel %vm266, %v249, 0
    %v361 = vsel %vm266, %v250, 0
    %vm363 = vcmask 1041408
    %v365 = vsel %vm363, %v263, 0
    %367 = vmatprep.subr.bf16.mxu0 0
    %368 = vmatpush1.bf16.msra.mxu0 0
    %369 = vmatprep.subr.bf16.mxu0 0
    %370 = vmatpush1.bf16.msra.mxu0 0
    %371 = vmatprep.subr.bf16.mxu0 0
    %372 = vmatpush1.bf16.msra.mxu0 0
    %373 = vmatprep.subr.bf16.mxu0 0
    %374 = vmatpush1.bf16.msra.mxu0 0
    %375 = vmatprep.subr.bf16.mxu0 0
    %376 = vmatpush1.bf16.msra.mxu0 0
    %377 = vmatprep.subr.bf16.mxu0 0
    %378 = vmatpush1.bf16.msra.mxu0 %v365
    %379 = vmatprep.subr.bf16.mxu0 0
    %380 = vmatpush1.bf16.msra.mxu0 %v262
    %381 = vmatprep.subr.bf16.mxu0 0
    %382 = vmatpush1.bf16.msra.mxu0 %v261
    %383 = vmatprep.subr.bf16.mxu0 0
    %384 = vmatpush2.bf16.msra.mxu0 0
    %385 = vmatprep.subr.bf16.mxu0 0
    %386 = vmatpush2.bf16.msra.mxu0 0
    %387 = vmatprep.subr.bf16.mxu0 0
    %388 = vmatpush2.bf16.msra.mxu0 0
    %389 = vmatprep.subr.bf16.mxu0 0
    %390 = vmatpush2.bf16.msra.mxu0 0
    %391 = vmatprep.subr.bf16.mxu0 0
    %392 = vmatpush2.bf16.msra.mxu0 0
    %393 = vmatprep.subr.bf16.mxu0 0
    %394 = vmatpush2.bf16.msra.mxu0 0
    %395 = vmatprep.subr.bf16.mxu0 0
    %396 = vmatpush2.bf16.msra.mxu0 0
    %397 = vmatprep.subr.bf16.mxu0 0
    %398 = vmatpush2.bf16.msra.mxu0 0
    %399 = vmatprep.mubr.bf16.mxu0 0
    %400 = vmatmul.mubr.bf16.gmra.mxu0 %v268
    %v401 = vpop.f32.mrf.mxu0
    %v402 = vadd.f32 0.0, %v401
    %v403 = vpop.f32.mrf.mxu0
    %v404 = vpop.f32.mrf.mxu0
    %v405 = vadd.f32 0.0, %v404
    %v406 = vpop.f32.mrf.mxu0
    %407 = vmatprep.mubr.bf16.mxu0 0
    %408 = vmatmul.mubr.bf16.gmra.mxu0 %v271
    %v409 = vpop.f32.mrf.mxu0
    %v410 = vadd.f32 0.0, %v409
    %v411 = vpop.f32.mrf.mxu0
    %v412 = vpop.f32.mrf.mxu0
    %v413 = vadd.f32 0.0, %v412
    %v414 = vpop.f32.mrf.mxu0
    %415 = vmatprep.mubr.bf16.mxu0 0
    %416 = vmatmul.mubr.bf16.gmra.mxu0 %v274
    %v417 = vpop.f32.mrf.mxu0
    %v418 = vadd.f32 0.0, %v417
    %v419 = vpop.f32.mrf.mxu0
    %v420 = vpop.f32.mrf.mxu0
    %v421 = vadd.f32 0.0, %v420
    %v422 = vpop.f32.mrf.mxu0
    %423 = vmatprep.mubr.bf16.mxu0 0
    %424 = vmatmul.mubr.bf16.gmra.mxu0 %v277
    %v425 = vpop.f32.mrf.mxu0
    %v426 = vadd.f32 0.0, %v425
    %v427 = vpop.f32.mrf.mxu0
    %v428 = vpop.f32.mrf.mxu0
    %v429 = vadd.f32 0.0, %v428
    %v430 = vpop.f32.mrf.mxu0
    %431 = vmatprep.mubr.bf16.mxu0 0
    %432 = vmatmul.mubr.bf16.gmra.mxu0 %v280
    %v433 = vpop.f32.mrf.mxu0
    %v434 = vadd.f32 0.0, %v433
    %v435 = vpop.f32.mrf.mxu0
    %v436 = vpop.f32.mrf.mxu0
    %v437 = vadd.f32 0.0, %v436
    %v438 = vpop.f32.mrf.mxu0
    %439 = vmatprep.mubr.bf16.mxu0 0
    %440 = vmatmul.mubr.bf16.gmra.mxu0 %v283
    %v441 = vpop.f32.mrf.mxu0
    %v442 = vadd.f32 0.0, %v441
    %v443 = vpop.f32.mrf.mxu0
    %v444 = vpop.f32.mrf.mxu0
    %v445 = vadd.f32 0.0, %v444
    %v446 = vpop.f32.mrf.mxu0
    %447 = vmatprep.mubr.bf16.mxu0 0
    %448 = vmatmul.mubr.bf16.gmra.mxu0 %v286
    %v449 = vpop.f32.mrf.mxu0
    %v450 = vadd.f32 0.0, %v449
    %v451 = vpop.f32.mrf.mxu0
    %v452 = vpop.f32.mrf.mxu0
    %v453 = vadd.f32 0.0, %v452
    %v454 = vpop.f32.mrf.mxu0
    %455 = vmatprep.mubr.bf16.mxu0 0
    %456 = vmatmul.mubr.bf16.gmra.mxu0 %v289
    %v457 = vpop.f32.mrf.mxu0
    %v458 = vadd.f32 0.0, %v457
    %v459 = vpop.f32.mrf.mxu0
    %v460 = vpop.f32.mrf.mxu0
    %v461 = vadd.f32 0.0, %v460
    %v462 = vpop.f32.mrf.mxu0
    %463 = vmatprep.mubr.bf16.mxu0 0
    %464 = vmatmul.mubr.bf16.gmra.mxu0 %v292
    %v465 = vpop.f32.mrf.mxu0
    %v466 = vadd.f32 0.0, %v465
    %v467 = vpop.f32.mrf.mxu0
    %v468 = vpop.f32.mrf.mxu0
    %v469 = vadd.f32 0.0, %v468
    %v470 = vpop.f32.mrf.mxu0
    %471 = vmatprep.mubr.bf16.mxu0 0
    %472 = vmatmul.mubr.bf16.gmra.mxu0 %v295
    %v473 = vpop.f32.mrf.mxu0
    %v474 = vadd.f32 0.0, %v473
    %v475 = vpop.f32.mrf.mxu0
    %v476 = vpop.f32.mrf.mxu0
    %v477 = vadd.f32 0.0, %v476
    %v478 = vpop.f32.mrf.mxu0
    %479 = vmatprep.mubr.bf16.mxu0 0
    %480 = vmatmul.mubr.bf16.gmra.mxu0 %v298
    %v481 = vpop.f32.mrf.mxu0
    %v482 = vadd.f32 0.0, %v481
    %v483 = vpop.f32.mrf.mxu0
    %v484 = vpop.f32.mrf.mxu0
    %v485 = vadd.f32 0.0, %v484
    %v486 = vpop.f32.mrf.mxu0
    %487 = vmatprep.mubr.bf16.mxu0 0
    %488 = vmatmul.mubr.bf16.gmra.mxu0 %v301
    %v489 = vpop.f32.mrf.mxu0
    %v490 = vadd.f32 0.0, %v489
    %v491 = vpop.f32.mrf.mxu0
    %v492 = vpop.f32.mrf.mxu0
    %v493 = vadd.f32 0.0, %v492
    %v494 = vpop.f32.mrf.mxu0
    %495 = vmatprep.mubr.bf16.mxu0 0
    %496 = vmatmul.mubr.bf16.gmra.mxu0 %v304
    %v497 = vpop.f32.mrf.mxu0
    %v498 = vadd.f32 0.0, %v497
    %v499 = vpop.f32.mrf.mxu0
    %v500 = vpop.f32.mrf.mxu0
    %v501 = vadd.f32 0.0, %v500
    %v502 = vpop.f32.mrf.mxu0
    %503 = vmatprep.mubr.bf16.mxu0 0
    %504 = vmatmul.mubr.bf16.gmra.mxu0 %v307
    %v505 = vpop.f32.mrf.mxu0
    %v506 = vadd.f32 0.0, %v505
    %v507 = vpop.f32.mrf.mxu0
    %v508 = vpop.f32.mrf.mxu0
    %v509 = vadd.f32 0.0, %v508
    %v510 = vpop.f32.mrf.mxu0
    %511 = vmatprep.mubr.bf16.mxu0 0
    %512 = vmatmul.mubr.bf16.gmra.mxu0 %v310
    %v513 = vpop.f32.mrf.mxu0
    %v514 = vadd.f32 0.0, %v513
    %v515 = vpop.f32.mrf.mxu0
    %v516 = vpop.f32.mrf.mxu0
    %v517 = vadd.f32 0.0, %v516
    %v518 = vpop.f32.mrf.mxu0
    %519 = vmatprep.mubr.bf16.mxu0 0
    %520 = vmatmul.mubr.bf16.gmra.mxu0 %v313
    %v521 = vpop.f32.mrf.mxu0
    %v522 = vadd.f32 0.0, %v521
    %v523 = vpop.f32.mrf.mxu0
    %v524 = vpop.f32.mrf.mxu0
    %v525 = vadd.f32 0.0, %v524
    %v526 = vpop.f32.mrf.mxu0
    %527 = vmatprep.mubr.bf16.mxu0 0
    %528 = vmatmul.mubr.bf16.gmra.mxu0 %v316
    %v529 = vpop.f32.mrf.mxu0
    %v530 = vadd.f32 0.0, %v529
    %v531 = vpop.f32.mrf.mxu0
    %v532 = vpop.f32.mrf.mxu0
    %v533 = vadd.f32 0.0, %v532
    %v534 = vpop.f32.mrf.mxu0
    %535 = vmatprep.mubr.bf16.mxu0 0
    %536 = vmatmul.mubr.bf16.gmra.mxu0 %v319
    %v537 = vpop.f32.mrf.mxu0
    %v538 = vadd.f32 0.0, %v537
    %v539 = vpop.f32.mrf.mxu0
    %v540 = vpop.f32.mrf.mxu0
    %v541 = vadd.f32 0.0, %v540
    %v542 = vpop.f32.mrf.mxu0
    %543 = vmatprep.mubr.bf16.mxu0 0
    %544 = vmatmul.mubr.bf16.gmra.mxu0 %v322
    %v545 = vpop.f32.mrf.mxu0
    %v546 = vadd.f32 0.0, %v545
    %v547 = vpop.f32.mrf.mxu0
    %v548 = vpop.f32.mrf.mxu0
    %v549 = vadd.f32 0.0, %v548
    %v550 = vpop.f32.mrf.mxu0
    %551 = vmatprep.mubr.bf16.mxu0 0
    %552 = vmatmul.mubr.bf16.gmra.mxu0 %v325
    %v553 = vpop.f32.mrf.mxu0
    %v554 = vadd.f32 0.0, %v553
    %v555 = vpop.f32.mrf.mxu0
    %v556 = vpop.f32.mrf.mxu0
    %v557 = vadd.f32 0.0, %v556
    %v558 = vpop.f32.mrf.mxu0
    %559 = vmatprep.mubr.bf16.mxu0 0
    %560 = vmatmul.mubr.bf16.gmra.mxu0 %v328
    %v561 = vpop.f32.mrf.mxu0
    %v562 = vadd.f32 0.0, %v561
    %v563 = vpop.f32.mrf.mxu0
    %v564 = vpop.f32.mrf.mxu0
    %v565 = vadd.f32 0.0, %v564
    %v566 = vpop.f32.mrf.mxu0
    %567 = vmatprep.mubr.bf16.mxu0 0
    %568 = vmatmul.mubr.bf16.gmra.mxu0 %v331
    %v569 = vpop.f32.mrf.mxu0
    %v570 = vadd.f32 0.0, %v569
    %v571 = vpop.f32.mrf.mxu0
    %v572 = vpop.f32.mrf.mxu0
    %v573 = vadd.f32 0.0, %v572
    %v574 = vpop.f32.mrf.mxu0
    %575 = vmatprep.mubr.bf16.mxu0 0
    %576 = vmatmul.mubr.bf16.gmra.mxu0 %v334
    %v577 = vpop.f32.mrf.mxu0
    %v578 = vadd.f32 0.0, %v577
    %v579 = vpop.f32.mrf.mxu0
    %v580 = vpop.f32.mrf.mxu0
    %v581 = vadd.f32 0.0, %v580
    %v582 = vpop.f32.mrf.mxu0
    %583 = vmatprep.mubr.bf16.mxu0 0
    %584 = vmatmul.mubr.bf16.gmra.mxu0 %v337
    %v585 = vpop.f32.mrf.mxu0
    %v586 = vadd.f32 0.0, %v585
    %v587 = vpop.f32.mrf.mxu0
    %v588 = vpop.f32.mrf.mxu0
    %v589 = vadd.f32 0.0, %v588
    %v590 = vpop.f32.mrf.mxu0
    %591 = vmatprep.mubr.bf16.mxu0 0
    %592 = vmatmul.mubr.bf16.gmra.mxu0 %v340
    %v593 = vpop.f32.mrf.mxu0
    %v594 = vadd.f32 0.0, %v593
    %v595 = vpop.f32.mrf.mxu0
    %v596 = vpop.f32.mrf.mxu0
    %v597 = vadd.f32 0.0, %v596
    %v598 = vpop.f32.mrf.mxu0
    %599 = vmatprep.mubr.bf16.mxu0 0
    %600 = vmatmul.mubr.bf16.gmra.mxu0 %v343
    %v601 = vpop.f32.mrf.mxu0
    %v602 = vadd.f32 0.0, %v601
    %v603 = vpop.f32.mrf.mxu0
    %v604 = vpop.f32.mrf.mxu0
    %v605 = vadd.f32 0.0, %v604
    %v606 = vpop.f32.mrf.mxu0
    %607 = vmatprep.mubr.bf16.mxu0 0
    %608 = vmatmul.mubr.bf16.gmra.mxu0 %v346
    %v609 = vpop.f32.mrf.mxu0
    %v610 = vadd.f32 0.0, %v609
    %v611 = vpop.f32.mrf.mxu0
    %v612 = vpop.f32.mrf.mxu0
    %v613 = vadd.f32 0.0, %v612
    %v614 = vpop.f32.mrf.mxu0
    %615 = vmatprep.mubr.bf16.mxu0 0
    %616 = vmatmul.mubr.bf16.gmra.mxu0 %v349
    %v617 = vpop.f32.mrf.mxu0
    %v618 = vadd.f32 0.0, %v617
    %v619 = vpop.f32.mrf.mxu0
    %v620 = vpop.f32.mrf.mxu0
    %v621 = vadd.f32 0.0, %v620
    %v622 = vpop.f32.mrf.mxu0
    %623 = vmatprep.mubr.bf16.mxu0 0
    %624 = vmatmul.mubr.bf16.gmra.mxu0 %v352
    %v625 = vpop.f32.mrf.mxu0
    %v626 = vadd.f32 0.0, %v625
    %v627 = vpop.f32.mrf.mxu0
    %v628 = vpop.f32.mrf.mxu0
    %v629 = vadd.f32 0.0, %v628
    %v630 = vpop.f32.mrf.mxu0
    %631 = vmatprep.mubr.bf16.mxu0 0
    %632 = vmatmul.mubr.bf16.gmra.mxu0 %v355
    %v633 = vpop.f32.mrf.mxu0
    %v634 = vadd.f32 0.0, %v633
    %v635 = vpop.f32.mrf.mxu0
    %v636 = vpop.f32.mrf.mxu0
    %v637 = vadd.f32 0.0, %v636
    %v638 = vpop.f32.mrf.mxu0
    %639 = vmatprep.mubr.bf16.mxu0 0
    %640 = vmatmul.mubr.bf16.gmra.mxu0 %v358
    %v641 = vpop.f32.mrf.mxu0
    %v642 = vadd.f32 0.0, %v641
    %v643 = vpop.f32.mrf.mxu0
    %v644 = vpop.f32.mrf.mxu0
    %v645 = vadd.f32 0.0, %v644
    %v646 = vpop.f32.mrf.mxu0
    %647 = vmatprep.mubr.bf16.mxu0 0
    %648 = vmatmul.mubr.bf16.gmra.mxu0 %v361
    %v649 = vpop.f32.mrf.mxu0
    %v650 = vadd.f32 0.0, %v649
    %v651 = vpop.f32.mrf.mxu0
    %v652 = vpop.f32.mrf.mxu0
    %v653 = vadd.f32 0.0, %v652
    %v654 = vpop.f32.mrf.mxu0
    %655 = vdwg.mxu0
    %v656 = vmax.f32 %v402, %v405
    %v657 = vmax.f32 %v656, %v410
    %v658 = vmax.f32 %v657, %v413
    %v659 = vmax.f32 %v658, %v418
    %v660 = vmax.f32 %v659, %v421
    %v661 = vmax.f32 %v660, %v426
    %v662 = vmax.f32 %v661, %v429
    %v663 = vrot.slane %v662, 4
    %v664 = vmax.f32 %v662, %v663
    %v665 = vrot.slane %v664, 2
    %v666 = vmax.f32 %v664, %v665
    %v667 = vrot.slane %v666, 1
    %v668 = vmax.f32 %v666, %v667
    %v669 = vmax.f32 %v434, %v437
    %v670 = vmax.f32 %v669, %v442
    %v671 = vmax.f32 %v670, %v445
    %v672 = vmax.f32 %v671, %v450
    %v673 = vmax.f32 %v672, %v453
    %v674 = vmax.f32 %v673, %v458
    %v675 = vmax.f32 %v674, %v461
    %v676 = vrot.slane %v675, 4
    %v677 = vmax.f32 %v675, %v676
    %v678 = vrot.slane %v677, 2
    %v679 = vmax.f32 %v677, %v678
    %v680 = vrot.slane %v679, 1
    %v681 = vmax.f32 %v679, %v680
    %v682 = vmax.f32 %v466, %v469
    %v683 = vmax.f32 %v682, %v474
    %v684 = vmax.f32 %v683, %v477
    %v685 = vmax.f32 %v684, %v482
    %v686 = vmax.f32 %v685, %v485
    %v687 = vmax.f32 %v686, %v490
    %v688 = vmax.f32 %v687, %v493
    %v689 = vrot.slane %v688, 4
    %v690 = vmax.f32 %v688, %v689
    %v691 = vrot.slane %v690, 2
    %v692 = vmax.f32 %v690, %v691
    %v693 = vrot.slane %v692, 1
    %v694 = vmax.f32 %v692, %v693
    %v695 = vmax.f32 %v498, %v501
    %v696 = vmax.f32 %v695, %v506
    %v697 = vmax.f32 %v696, %v509
    %v698 = vmax.f32 %v697, %v514
    %v699 = vmax.f32 %v698, %v517
    %v700 = vmax.f32 %v699, %v522
    %v701 = vmax.f32 %v700, %v525
    %v702 = vrot.slane %v701, 4
    %v703 = vmax.f32 %v701, %v702
    %v704 = vrot.slane %v703, 2
    %v705 = vmax.f32 %v703, %v704
    %v706 = vrot.slane %v705, 1
    %v707 = vmax.f32 %v705, %v706
    %v708 = vmax.f32 %v530, %v533
    %v709 = vmax.f32 %v708, %v538
    %v710 = vmax.f32 %v709, %v541
    %v711 = vmax.f32 %v710, %v546
    %v712 = vmax.f32 %v711, %v549
    %v713 = vmax.f32 %v712, %v554
    %v714 = vmax.f32 %v713, %v557
    %v715 = vrot.slane %v714, 4
    %v716 = vmax.f32 %v714, %v715
    %v717 = vrot.slane %v716, 2
    %v718 = vmax.f32 %v716, %v717
    %v719 = vrot.slane %v718, 1
    %v720 = vmax.f32 %v718, %v719
    %v721 = vmax.f32 %v562, %v565
    %v722 = vmax.f32 %v721, %v570
    %v723 = vmax.f32 %v722, %v573
    %v724 = vmax.f32 %v723, %v578
    %v725 = vmax.f32 %v724, %v581
    %v726 = vmax.f32 %v725, %v586
    %v727 = vmax.f32 %v726, %v589
    %v728 = vrot.slane %v727, 4
    %v729 = vmax.f32 %v727, %v728
    %v730 = vrot.slane %v729, 2
    %v731 = vmax.f32 %v729, %v730
    %v732 = vrot.slane %v731, 1
    %v733 = vmax.f32 %v731, %v732
    %v734 = vmax.f32 %v594, %v597
    %v735 = vmax.f32 %v734, %v602
    %v736 = vmax.f32 %v735, %v605
    %v737 = vmax.f32 %v736, %v610
    %v738 = vmax.f32 %v737, %v613
    %v739 = vmax.f32 %v738, %v618
    %v740 = vmax.f32 %v739, %v621
    %v741 = vrot.slane %v740, 4
    %v742 = vmax.f32 %v740, %v741
    %v743 = vrot.slane %v742, 2
    %v744 = vmax.f32 %v742, %v743
    %v745 = vrot.slane %v744, 1
    %v746 = vmax.f32 %v744, %v745
    %v747 = vmax.f32 %v626, %v629
    %v748 = vmax.f32 %v747, %v634
    %v749 = vmax.f32 %v748, %v637
    %v750 = vmax.f32 %v749, %v642
    %v751 = vmax.f32 %v750, %v645
    %v752 = vmax.f32 %v751, %v650
    %v753 = vmax.f32 %v752, %v653
    %v754 = vrot.slane %v753, 4
    %v755 = vmax.f32 %v753, %v754
    %v756 = vrot.slane %v755, 2
    %v757 = vmax.f32 %v755, %v756
    %v758 = vrot.slane %v757, 1
    %v759 = vmax.f32 %v757, %v758
    %v760 = vld [vmem:[%s2] sm:$0x1]
    %v762 = vlaneseq
    %v763 = vshrl.u32 %v762, 7
    %v764 = vsub.s32 0, %v763
    %v765 = vrot.slane %v760, %v764
    %v767 = vadd.f32 %v668, %v765
    %v768 = vadd.f32 %v681, %v765
    %v769 = vadd.f32 %v694, %v765
    %v770 = vadd.f32 %v707, %v765
    %v771 = vadd.f32 %v720, %v765
    %v772 = vadd.f32 %v733, %v765
    %v773 = vadd.f32 %v746, %v765
    %v774 = vadd.f32 %v759, %v765
    %v775 = vmax.f32 %v767, 0.0
    %v776 = vmax.f32 %v768, 0.0
    %v777 = vmax.f32 %v769, 0.0
    %v778 = vmax.f32 %v770, 0.0
    %v779 = vmax.f32 %v771, 0.0
    %v780 = vmax.f32 %v772, 0.0
    %v781 = vmax.f32 %v773, 0.0
    %v782 = vmax.f32 %v774, 0.0
    %v783 = vpack.c.bf16 %v775, %v775
    %v784 = vpack.c.bf16 %v776, %v776
    %v785 = vpack.c.bf16 %v777, %v777
    %v786 = vpack.c.bf16 %v778, %v778
    %v787 = vpack.c.bf16 %v779, %v779
    %v788 = vpack.c.bf16 %v780, %v780
    %v789 = vpack.c.bf16 %v781, %v781
    %v790 = vpack.c.bf16 %v782, %v782
    %v791 = vld [vmem:[%s3] sm:$0xf]
    %v792 = vld [vmem:[%s3 + $0x4] sm:$0xf]
    %v793 = vld [vmem:[%s3 + $0x8] sm:$0xf]
    %v794 = vld [vmem:[%s3 + $0xc] sm:$0xf]
    %v795 = vld [vmem:[%s3 + $0x10] sm:$0xf]
    %v796 = vld [vmem:[%s3 + $0x14] sm:$0xf]
    %v797 = vld [vmem:[%s3 + $0x18] sm:$0xf]
    %v798 = vld [vmem:[%s3 + $0x1c] sm:$0xf]
    %v799 = vld [vmem:[%s3 + $0x20] sm:$0xf]
    %v800 = vld [vmem:[%s3 + $0x24] sm:$0xf]
    %v801 = vld [vmem:[%s3 + $0x28] sm:$0xf]
    %v802 = vld [vmem:[%s3 + $0x2c] sm:$0xf]
    %v803 = vld [vmem:[%s3 + $0x30] sm:$0xf]
    %v804 = vld [vmem:[%s3 + $0x34] sm:$0xf]
    %v805 = vld [vmem:[%s3 + $0x38] sm:$0xf]
    %v806 = vld [vmem:[%s3 + $0x3c] sm:$0xf]
    %v807 = vld [vmem:[%s4] sm:$0x1]
    %v809 = vlaneseq
    %v810 = vshrl.u32 %v809, 7
    %v811 = vsub.s32 0, %v810
    %v812 = vrot.slane %v807, %v811
    %v822 = vunpack.c.l.b16 %v783
    %v823 = vunpack.c.l.b16 %v784
    %v824 = vunpack.c.l.b16 %v785
    %v825 = vunpack.c.l.b16 %v786
    %v826 = vunpack.c.l.b16 %v787
    %v827 = vunpack.c.l.b16 %v788
    %v828 = vunpack.c.l.b16 %v789
    %v829 = vunpack.c.l.b16 %v790
    %v830 = vrot.slane %v823, 7
    %vm831 = vcmask 1041409
    %v832 = vsel %vm831, %v830, %v822
    %v833 = vrot.slane %v824, 6
    %vm834 = vcmask 1042434
    %v835 = vsel %vm834, %v833, %v832
    %v836 = vrot.slane %v825, 5
    %vm837 = vcmask 1043459
    %v838 = vsel %vm837, %v836, %v835
    %v839 = vrot.slane %v826, 4
    %vm840 = vcmask 1044484
    %v841 = vsel %vm840, %v839, %v838
    %v842 = vrot.slane %v827, 3
    %vm843 = vcmask 1045509
    %v844 = vsel %vm843, %v842, %v841
    %v845 = vrot.slane %v828, 2
    %vm846 = vcmask 1046534
    %v847 = vsel %vm846, %v845, %v844
    %v848 = vrot.slane %v829, 1
    %vm849 = vcmask 1047559
    %v850 = vsel %vm849, %v848, %v847
    %v851 = vpack.c.b16 %v850, %v850
    %v869 = vunpack.c.l.b16 %v791
    %v870 = vunpack.c.l.b16 %v792
    %v871 = vunpack.c.l.b16 %v793
    %v872 = vunpack.c.l.b16 %v794
    %v873 = vunpack.c.l.b16 %v795
    %v874 = vunpack.c.l.b16 %v796
    %v875 = vunpack.c.l.b16 %v797
    %v876 = vunpack.c.l.b16 %v798
    %v877 = vunpack.c.l.b16 %v799
    %v878 = vunpack.c.l.b16 %v800
    %v879 = vunpack.c.l.b16 %v801
    %v880 = vunpack.c.l.b16 %v802
    %v881 = vunpack.c.l.b16 %v803
    %v882 = vunpack.c.l.b16 %v804
    %v883 = vunpack.c.l.b16 %v805
    %v884 = vunpack.c.l.b16 %v806
    %v885 = vpack.c.b16 %v870, %v869
    %v886 = vpack.c.b16 %v872, %v871
    %v887 = vpack.c.b16 %v874, %v873
    %v888 = vpack.c.b16 %v876, %v875
    %v889 = vpack.c.b16 %v878, %v877
    %v890 = vpack.c.b16 %v880, %v879
    %v891 = vpack.c.b16 %v882, %v881
    %v892 = vpack.c.b16 %v884, %v883
    %901 = vmatprep.subr.bf16.mxu0 0
    %902 = vmatpush1.bf16.msra.mxu0 %v892
    %903 = vmatprep.subr.bf16.mxu0 0
    %904 = vmatpush1.bf16.msra.mxu0 %v891
    %905 = vmatprep.subr.bf16.mxu0 0
    %906 = vmatpush1.bf16.msra.mxu0 %v890
    %907 = vmatprep.subr.bf16.mxu0 0
    %908 = vmatpush1.bf16.msra.mxu0 %v889
    %909 = vmatprep.subr.bf16.mxu0 0
    %910 = vmatpush1.bf16.msra.mxu0 %v888
    %911 = vmatprep.subr.bf16.mxu0 0
    %912 = vmatpush1.bf16.msra.mxu0 %v887
    %913 = vmatprep.subr.bf16.mxu0 0
    %914 = vmatpush1.bf16.msra.mxu0 %v886
    %915 = vmatprep.subr.bf16.mxu0 0
    %916 = vmatpush1.bf16.msra.mxu0 %v885
    %917 = vmatprep.subr.bf16.mxu0 0
    %918 = vmatpush2.bf16.msra.mxu0 0
    %919 = vmatprep.subr.bf16.mxu0 0
    %920 = vmatpush2.bf16.msra.mxu0 0
    %921 = vmatprep.subr.bf16.mxu0 0
    %922 = vmatpush2.bf16.msra.mxu0 0
    %923 = vmatprep.subr.bf16.mxu0 0
    %924 = vmatpush2.bf16.msra.mxu0 0
    %925 = vmatprep.subr.bf16.mxu0 0
    %926 = vmatpush2.bf16.msra.mxu0 0
    %927 = vmatprep.subr.bf16.mxu0 0
    %928 = vmatpush2.bf16.msra.mxu0 0
    %929 = vmatprep.subr.bf16.mxu0 0
    %930 = vmatpush2.bf16.msra.mxu0 0
    %931 = vmatprep.subr.bf16.mxu0 0
    %932 = vmatpush2.bf16.msra.mxu0 0
    %933 = vmatprep.mubr.bf16.mxu0 0
    %934 = vmatmul.mubr.bf16.gmra.mxu0 %v851
    %v935 = vpop.f32.mrf.mxu0
    %v936 = vadd.f32 %v812, %v935
    %v937 = vpop.f32.mrf.mxu0
    %v938 = vpop.f32.mrf.mxu0
    %v939 = vpop.f32.mrf.mxu0
    %940 = vdwg.mxu0
    %941 = vst [vmem:[#allocation2] sm:$0xff] %v936
    // Predicated region
    $region22: #{tpu_custom_call.1} parent=1 // pred_check
      _
    $region23: #{tpu_custom_call.1} parent=1 // pred_check_branch
      %943 = sbr.rel (0) target = $region25
    $region24: #{tpu_custom_call.1} parent=1 // pred_region
      %s945 = ssub.s32 128, 128
      %946 = vsyncadd [#allocation3], %s945
      %s948 = sshll.u32 [#allocation2], 4
      %s949 = int_to_ptr.vmem [resolvable:$true] %s948
      %951 = dma.vmem_to_hbm [thread:$0]  %s949, 128, %s5, [#allocation3]
    $region25: #{tpu_custom_call.1} parent=1 // pred_fallthru
      _
    // Predicated region
    $region26: #{tpu_custom_call.1} parent=1 // pred_check
      _
    $region27: #{tpu_custom_call.1} parent=1 // pred_check_branch
      %953 = sbr.rel (0) target = $region29
    $region28: #{tpu_custom_call.1} parent=1 // pred_region
      %954 = dma.done [#allocation3], 128
    $region29: #{tpu_custom_call.1} parent=1 // pred_fallthru
      _
    %955 = vsyncpa [#allocation3], 1

</llo_original>
